<compile_context>
chip_gen: v7x
topology: tpu7x:2x2x1
jax: 0.10.0
libtpu: 0.0.40
codegen_flags: <defaults>
</compile_context>

<pallas_src>
import jax
import jax.numpy as jnp
from jax.experimental import pallas as pl
from jax.experimental.pallas import tpu as pltpu

LOG_STD_MIN = -20.0
LOG_STD_MAX = 2.0
HEAD_ROWS = 8  # row 0 = mean, row 1 = log_std, rows 2..7 zero padding


def actor_kernel(x_ref, w1_ref, b1_ref, w2_ref, b2_ref, wh_ref, bh_ref,
                 lo_ref, hi_ref, out_ref):
    # x: (S, TB) bf16, batch on lanes.
    x = x_ref[...]

    # fc1: (H, S) @ (S, TB) -> (H, TB) f32
    h = jnp.dot(w1_ref[...], x, preferred_element_type=jnp.float32)
    h = jnp.maximum(h + b1_ref[...], 0.0)

    # fc2: (H, H) @ (H, TB) -> (H, TB) f32
    h = jnp.dot(w2_ref[...], h.astype(w2_ref.dtype),
                preferred_element_type=jnp.float32)
    h = jnp.maximum(h + b2_ref[...], 0.0)

    # fused heads: (8, H) @ (H, TB) -> (8, TB); row 0 = mean, row 1 = log_std.
    heads = jnp.dot(wh_ref[...], h.astype(wh_ref.dtype),
                    preferred_element_type=jnp.float32) + bh_ref[...]

    # Row-selective clamp via precomputed bounds (+/-inf on non-log_std rows).
    out = jnp.minimum(jnp.maximum(heads, lo_ref[...]), hi_ref[...])
    out_ref[...] = out.astype(out_ref.dtype)


def actor_forward(state, params, *, block_b=512):
    """state: (B, state_dim) f32.  Returns (mean, log_std), each (B, 1) f32."""
    B, S = state.shape
    w1, b1 = params["w1t"], params["b1t"]
    w2, b2 = params["w2t"], params["b2t"]
    wh, bh = params["wh8"], params["bh8"]
    lo, hi = params["clip_lo"], params["clip_hi"]

    # Batch tile: either the whole (8-padded) batch, or a multiple of 128 so
    # the (8, tb) output stores stay unmasked; keep >=2 grid steps when we can
    # so the 'parallel' axis uses both TensorCores on v7x.
    b_ceil8 = pl.cdiv(B, 8) * 8
    if b_ceil8 < 256:
        tb = b_ceil8
    else:
        tb = min(block_b, max(128, ((b_ceil8 // 2) // 128) * 128))
    b_pad = pl.cdiv(B, tb) * tb
    grid = (b_pad // tb,)

    # Transposed, bf16 activations: (S, B) with batch on lanes.
    x_t = jnp.transpose(state).astype(jnp.bfloat16)
    if b_pad != B:
        x_t = jnp.pad(x_t, ((0, 0), (0, b_pad - B)))

    def resident(a):
        return pl.BlockSpec(a.shape, lambda i: (0,) * a.ndim)

    in_specs = [
        pl.BlockSpec((S, tb), lambda i: (0, i)),  # state^T: tiled over batch
        resident(w1), resident(b1),               # weights stay VMEM-resident
        resident(w2), resident(b2),
        resident(wh), resident(bh),
        resident(lo), resident(hi),
    ]
    out_specs = pl.BlockSpec((HEAD_ROWS, tb), lambda i: (0, i))

    packed = pl.pallas_call(
        actor_kernel,
        out_shape=jax.ShapeDtypeStruct((HEAD_ROWS, b_pad), jnp.float32),
        grid=grid,
        in_specs=in_specs,
        out_specs=out_specs,
        compiler_params=pltpu.CompilerParams(
            dimension_semantics=("parallel",)),   # megacore sharding on v7x
    )(x_t, w1, b1, w2, b2, wh, bh, lo, hi)

    mean = packed[0, :B].reshape(B, 1)
    log_std = packed[1, :B].reshape(B, 1)
    return mean, log_std


def init_params(key, state_dim, hidden_size):
    """Mimics nn.Linear init U(-1/sqrt(fan_in), 1/sqrt(fan_in)).

    Weights are stored in PyTorch (out_features, in_features) orientation as
    bf16 (MXU operands); biases / clip bounds stay f32.  The two 1-wide heads
    are packed into a single (8, hidden) weight: row 0 = mean, row 1 = log_std.
    """
    ks = jax.random.split(key, 8)

    def lin(kw, kb, fan_in, fan_out):
        bound = 1.0 / jnp.sqrt(jnp.float32(fan_in))
        w = jax.random.uniform(kw, (fan_out, fan_in), jnp.float32, -bound, bound)
        b = jax.random.uniform(kb, (fan_out, 1), jnp.float32, -bound, bound)
        return w, b

    w1, b1 = lin(ks[0], ks[1], state_dim, hidden_size)
    w2, b2 = lin(ks[2], ks[3], hidden_size, hidden_size)
    wm, bm = lin(ks[4], ks[5], hidden_size, 1)
    ws, bs = lin(ks[6], ks[7], hidden_size, 1)

    wh8 = jnp.zeros((HEAD_ROWS, hidden_size), jnp.float32)
    wh8 = wh8.at[0:1, :].set(wm).at[1:2, :].set(ws)
    bh8 = jnp.zeros((HEAD_ROWS, 1), jnp.float32)
    bh8 = bh8.at[0:1, :].set(bm).at[1:2, :].set(bs)

    clip_lo = jnp.full((HEAD_ROWS, 1), -jnp.inf, jnp.float32).at[1, 0].set(LOG_STD_MIN)
    clip_hi = jnp.full((HEAD_ROWS, 1), jnp.inf, jnp.float32).at[1, 0].set(LOG_STD_MAX)

    return {
        "w1t": w1.astype(jnp.bfloat16), "b1t": b1,
        "w2t": w2.astype(jnp.bfloat16), "b2t": b2,
        "wh8": wh8.astype(jnp.bfloat16), "bh8": bh8,
        "clip_lo": clip_lo, "clip_hi": clip_hi,
    }


def actor_forward_ref(state, p):
    """Pure-JAX reference with the same bf16-operand / f32-accumulate numerics."""
    x = state.astype(jnp.bfloat16)
    h = jnp.dot(x, p["w1t"].T, preferred_element_type=jnp.float32) + p["b1t"].T
    h = jnp.maximum(h, 0.0).astype(jnp.bfloat16)
    h = jnp.dot(h, p["w2t"].T, preferred_element_type=jnp.float32) + p["b2t"].T
    h = jnp.maximum(h, 0.0).astype(jnp.bfloat16)
    heads = jnp.dot(h, p["wh8"].T, preferred_element_type=jnp.float32) + p["bh8"].T
    mean = heads[:, 0:1]
    log_std = jnp.clip(heads[:, 1:2], LOG_STD_MIN, LOG_STD_MAX)
    return mean, log_std


if __name__ == "__main__":
    key = jax.random.PRNGKey(0)
    k_state, k_params, k_big = jax.random.split(key, 3)

    batch = 64
    state_dim = 16
    hidden_size = 256          # module default; fills the 256-wide MXU on v6e/v7x

    state = jax.random.normal(k_state, (batch, state_dim), jnp.float32)
    params = init_params(k_params, state_dim, hidden_size)

    mean, log_std = actor_forward(state, params)
    jax.block_until_ready((mean, log_std))

    mean_ref, log_std_ref = actor_forward_ref(state, params)
    assert mean.shape == (batch, 1) and log_std.shape == (batch, 1)
    assert jnp.allclose(mean, mean_ref, atol=2e-3, rtol=2e-3)
    assert jnp.allclose(log_std, log_std_ref, atol=2e-3, rtol=2e-3)
    assert bool(jnp.all(log_std >= LOG_STD_MIN)) and bool(jnp.all(log_std <= LOG_STD_MAX))

    # Odd / tiny batch (pads to a sublane multiple, single grid step).
    small = state[:10]
    m2, s2 = actor_forward(small, params)
    jax.block_until_ready((m2, s2))
    m2r, s2r = actor_forward_ref(small, params)
    assert jnp.allclose(m2, m2r, atol=2e-3, rtol=2e-3)
    assert jnp.allclose(s2, s2r, atol=2e-3, rtol=2e-3)

    # Larger, non-multiple batch: exercises the 128-multiple tile, batch
    # padding and the multi-step 'parallel' grid (2 TCs on v7x).
    big = jax.random.normal(k_big, (300, state_dim), jnp.float32)
    m3, s3 = actor_forward(big, params)
    jax.block_until_ready((m3, s3))
    m3r, s3r = actor_forward_ref(big, params)
    assert m3.shape == (300, 1) and s3.shape == (300, 1)
    assert jnp.allclose(m3, m3r, atol=2e-3, rtol=2e-3)
    assert jnp.allclose(s3, s3r, atol=2e-3, rtol=2e-3)

    print("KERNEL_OK")
</pallas_src>

<mosaic_0001>
module attributes {stable_mosaic.version = 11 : i64} {
  func.func @actor_kernel(%arg0: i32, %arg1: memref<16x64xbf16, #tpu.memory_space<vmem>>, %arg2: memref<256x16xbf16, #tpu.memory_space<vmem>>, %arg3: memref<256x1xf32, #tpu.memory_space<vmem>>, %arg4: memref<256x256xbf16, #tpu.memory_space<vmem>>, %arg5: memref<256x1xf32, #tpu.memory_space<vmem>>, %arg6: memref<8x256xbf16, #tpu.memory_space<vmem>>, %arg7: memref<8x1xf32, #tpu.memory_space<vmem>>, %arg8: memref<8x1xf32, #tpu.memory_space<vmem>>, %arg9: memref<8x1xf32, #tpu.memory_space<vmem>>, %arg10: memref<8x64xf32, #tpu.memory_space<vmem>>) attributes {dimension_semantics = [#tpu.dimension_semantics<parallel>], iteration_bounds = array<i64: 1>, scalar_prefetch = 0 : i64, scratch_operands = 0 : i64, tpu.core_type = #tpu.core_type<tc>, window_params = [{transform_indices = @transform_0, window_bounds = array<i64: 16, 64>}, {pipeline_mode = #tpu.pipeline_mode<synchronous>, transform_indices = @transform_1, window_bounds = array<i64: 256, 16>}, {pipeline_mode = #tpu.pipeline_mode<synchronous>, transform_indices = @transform_2, window_bounds = array<i64: 256, 1>}, {pipeline_mode = #tpu.pipeline_mode<synchronous>, transform_indices = @transform_3, window_bounds = array<i64: 256, 256>}, {pipeline_mode = #tpu.pipeline_mode<synchronous>, transform_indices = @transform_4, window_bounds = array<i64: 256, 1>}, {pipeline_mode = #tpu.pipeline_mode<synchronous>, transform_indices = @transform_5, window_bounds = array<i64: 8, 256>}, {pipeline_mode = #tpu.pipeline_mode<synchronous>, transform_indices = @transform_6, window_bounds = array<i64: 8, 1>}, {pipeline_mode = #tpu.pipeline_mode<synchronous>, transform_indices = @transform_7, window_bounds = array<i64: 8, 1>}, {pipeline_mode = #tpu.pipeline_mode<synchronous>, transform_indices = @transform_8, window_bounds = array<i64: 8, 1>}, {transform_indices = @transform_9, window_bounds = array<i64: 8, 64>}]} {
    %c0 = arith.constant 0 : index
    %c0_0 = arith.constant 0 : index
    %0 = vector.load %arg1[%c0, %c0_0] : memref<16x64xbf16, #tpu.memory_space<vmem>>, vector<16x64xbf16>
    %c0_1 = arith.constant 0 : index
    %c0_2 = arith.constant 0 : index
    %1 = vector.load %arg2[%c0_1, %c0_2] : memref<256x16xbf16, #tpu.memory_space<vmem>>, vector<256x16xbf16>
    %cst = arith.constant dense<0.000000e+00> : vector<256x64xf32>
    %2 = tpu.matmul %1, %0, %cst {dimension_numbers = #tpu.dot_dimension_numbers<[1], [0], [0], [1], [0, 0, 1, 1], [], []>} : vector<256x16xbf16>, vector<16x64xbf16>, vector<256x64xf32> -> vector<256x64xf32>
    %c0_3 = arith.constant 0 : index
    %c0_4 = arith.constant 0 : index
    %3 = vector.load %arg3[%c0_3, %c0_4] : memref<256x1xf32, #tpu.memory_space<vmem>>, vector<256x1xf32>
    %4 = vector.broadcast %3 : vector<256x1xf32> to vector<256x64xf32>
    %5 = arith.addf %2, %4 : vector<256x64xf32>
    %cst_5 = arith.constant 0.000000e+00 : f32
    %6 = vector.broadcast %cst_5 : f32 to vector<256x64xf32>
    %7 = arith.maximumf %5, %6 : vector<256x64xf32>
    %c0_6 = arith.constant 0 : index
    %c0_7 = arith.constant 0 : index
    %8 = vector.load %arg4[%c0_6, %c0_7] : memref<256x256xbf16, #tpu.memory_space<vmem>>, vector<256x256xbf16>
    %9 = arith.truncf %7 : vector<256x64xf32> to vector<256x64xbf16>
    %cst_8 = arith.constant dense<0.000000e+00> : vector<256x64xf32>
    %10 = tpu.matmul %8, %9, %cst_8 {dimension_numbers = #tpu.dot_dimension_numbers<[1], [0], [0], [1], [0, 0, 1, 1], [], []>} : vector<256x256xbf16>, vector<256x64xbf16>, vector<256x64xf32> -> vector<256x64xf32>
    %c0_9 = arith.constant 0 : index
    %c0_10 = arith.constant 0 : index
    %11 = vector.load %arg5[%c0_9, %c0_10] : memref<256x1xf32, #tpu.memory_space<vmem>>, vector<256x1xf32>
    %12 = vector.broadcast %11 : vector<256x1xf32> to vector<256x64xf32>
    %13 = arith.addf %10, %12 : vector<256x64xf32>
    %cst_11 = arith.constant 0.000000e+00 : f32
    %14 = vector.broadcast %cst_11 : f32 to vector<256x64xf32>
    %15 = arith.maximumf %13, %14 : vector<256x64xf32>
    %c0_12 = arith.constant 0 : index
    %c0_13 = arith.constant 0 : index
    %16 = vector.load %arg6[%c0_12, %c0_13] : memref<8x256xbf16, #tpu.memory_space<vmem>>, vector<8x256xbf16>
    %17 = arith.truncf %15 : vector<256x64xf32> to vector<256x64xbf16>
    %cst_14 = arith.constant dense<0.000000e+00> : vector<8x64xf32>
    %18 = tpu.matmul %16, %17, %cst_14 {dimension_numbers = #tpu.dot_dimension_numbers<[1], [0], [0], [1], [0, 0, 1, 1], [], []>} : vector<8x256xbf16>, vector<256x64xbf16>, vector<8x64xf32> -> vector<8x64xf32>
    %c0_15 = arith.constant 0 : index
    %c0_16 = arith.constant 0 : index
    %19 = vector.load %arg7[%c0_15, %c0_16] : memref<8x1xf32, #tpu.memory_space<vmem>>, vector<8x1xf32>
    %20 = vector.broadcast %19 : vector<8x1xf32> to vector<8x64xf32>
    %21 = arith.addf %18, %20 : vector<8x64xf32>
    %c0_17 = arith.constant 0 : index
    %c0_18 = arith.constant 0 : index
    %22 = vector.load %arg8[%c0_17, %c0_18] : memref<8x1xf32, #tpu.memory_space<vmem>>, vector<8x1xf32>
    %23 = vector.broadcast %22 : vector<8x1xf32> to vector<8x64xf32>
    %24 = arith.maximumf %21, %23 : vector<8x64xf32>
    %c0_19 = arith.constant 0 : index
    %c0_20 = arith.constant 0 : index
    %25 = vector.load %arg9[%c0_19, %c0_20] : memref<8x1xf32, #tpu.memory_space<vmem>>, vector<8x1xf32>
    %26 = vector.broadcast %25 : vector<8x1xf32> to vector<8x64xf32>
    %27 = arith.minimumf %24, %26 : vector<8x64xf32>
    %c0_21 = arith.constant 0 : index
    %c0_22 = arith.constant 0 : index
    %28 = vector.load %arg10[%c0_21, %c0_22] : memref<8x64xf32, #tpu.memory_space<vmem>>, vector<8x64xf32>
    tpu.vector_store %arg10[%c0_21, %c0_22], %27 {strides = array<i32>} : memref<8x64xf32, #tpu.memory_space<vmem>>, vector<8x64xf32>,
    return
  }
  func.func @transform_0(%arg0: i32) -> (i32, i32) {
    %c0_i32 = arith.constant 0 : i32
    %c0_i32_0 = arith.constant 0 : i32
    return %c0_i32, %arg0 : i32, i32
  }
  func.func @transform_1(%arg0: i32) -> (i32, i32) {
    %c0_i32 = arith.constant 0 : i32
    %c0_i32_0 = arith.constant 0 : i32
    %c0_i32_1 = arith.constant 0 : i32
    return %c0_i32, %c0_i32_0 : i32, i32
  }
  func.func @transform_2(%arg0: i32) -> (i32, i32) {
    %c0_i32 = arith.constant 0 : i32
    %c0_i32_0 = arith.constant 0 : i32
    %c0_i32_1 = arith.constant 0 : i32
    return %c0_i32, %c0_i32_0 : i32, i32
  }
  func.func @transform_3(%arg0: i32) -> (i32, i32) {
    %c0_i32 = arith.constant 0 : i32
    %c0_i32_0 = arith.constant 0 : i32
    %c0_i32_1 = arith.constant 0 : i32
    return %c0_i32, %c0_i32_0 : i32, i32
  }
  func.func @transform_4(%arg0: i32) -> (i32, i32) {
    %c0_i32 = arith.constant 0 : i32
    %c0_i32_0 = arith.constant 0 : i32
    %c0_i32_1 = arith.constant 0 : i32
    return %c0_i32, %c0_i32_0 : i32, i32
  }
  func.func @transform_5(%arg0: i32) -> (i32, i32) {
    %c0_i32 = arith.constant 0 : i32
    %c0_i32_0 = arith.constant 0 : i32
    %c0_i32_1 = arith.constant 0 : i32
    return %c0_i32, %c0_i32_0 : i32, i32
  }
  func.func @transform_6(%arg0: i32) -> (i32, i32) {
    %c0_i32 = arith.constant 0 : i32
    %c0_i32_0 = arith.constant 0 : i32
    %c0_i32_1 = arith.constant 0 : i32
    return %c0_i32, %c0_i32_0 : i32, i32
  }
  func.func @transform_7(%arg0: i32) -> (i32, i32) {
    %c0_i32 = arith.constant 0 : i32
    %c0_i32_0 = arith.constant 0 : i32
    %c0_i32_1 = arith.constant 0 : i32
    return %c0_i32, %c0_i32_0 : i32, i32
  }
  func.func @transform_8(%arg0: i32) -> (i32, i32) {
    %c0_i32 = arith.constant 0 : i32
    %c0_i32_0 = arith.constant 0 : i32
    %c0_i32_1 = arith.constant 0 : i32
    return %c0_i32, %c0_i32_0 : i32, i32
  }
  func.func @transform_9(%arg0: i32) -> (i32, i32) {
    %c0_i32 = arith.constant 0 : i32
    %c0_i32_0 = arith.constant 0 : i32
    return %c0_i32, %arg0 : i32, i32
  }
}

</mosaic_0001>

<llo_original>
// kernel: tpu_custom_call.1
$region0: #{tpu_custom_call.1}
  #allocation0 [shape = 'u32[]', space=smem, size = 0x4, offset = 0x4, fixed_abs, tag = 'smem constant byte address 0x4 - core index']
  #allocation1 [shape = 'u32[144,128]{1,0:T(1,128)}', space=vmem, size = 0x12000, scoped, tag = 'internal scratch']
  %s0 = inlined_call_operand.vmem [shape: bf16[16,64], index: 0, kind: input, shape index: {}]
  %s1 = inlined_call_operand.vmem [shape: bf16[256,16], index: 1, kind: input, shape index: {}]
  %s2 = inlined_call_operand.vmem [shape: f32[256,1], index: 2, kind: input, shape index: {}]
  %s3 = inlined_call_operand.vmem [shape: bf16[256,256], index: 3, kind: input, shape index: {}]
  %s4 = inlined_call_operand.vmem [shape: f32[256,1], index: 4, kind: input, shape index: {}]
  %s5 = inlined_call_operand.vmem [shape: bf16[8,256], index: 5, kind: input, shape index: {}]
  %s6 = inlined_call_operand.vmem [shape: f32[8,1], index: 6, kind: input, shape index: {}]
  %s7 = inlined_call_operand.vmem [shape: f32[8,1], index: 7, kind: input, shape index: {}]
  %s8 = inlined_call_operand.vmem [shape: f32[8,1], index: 8, kind: input, shape index: {}]
  %s9 = inlined_call_operand.hbm [shape: f32[8,64], index: 9, kind: output, shape index: {}]
  %s10 = sld [smem:[#allocation0]]
  $region46: #{tpu_custom_call.1} parent=0
    _
  %s12 = ssub.s32 1, %s10
  %s13 = scalar_select 0, %s12, %s10
  $region1: #{tpu_custom_call.1} parent=0
    #allocation2 [shape = 'u8[4096]{0}', space=vmem, size = 0x1000, scoped, tag = 'output window, operand 0, single buffered']
    #allocation3 [shape = 's32[1]{0}', space=sflag, size = 0x4, scoped, tag = 'scoped memory for tpu_custom_call.1']
    %14 = vsyncpa [#allocation3], 0
    // Predicated region
    $region2: #{tpu_custom_call.1} parent=1 // pred_check
      _
    $region3: #{tpu_custom_call.1} parent=1 // pred_check_branch
      %16 = sbr.rel (0) target = $region5
    $region4: #{tpu_custom_call.1} parent=1 // pred_region
      _
    $region5: #{tpu_custom_call.1} parent=1 // pred_fallthru
      _
    // Predicated region
    $region6: #{tpu_custom_call.1} parent=1 // pred_check
      _
    $region7: #{tpu_custom_call.1} parent=1 // pred_check_branch
      %18 = sbr.rel (0) target = $region9
    $region8: #{tpu_custom_call.1} parent=1 // pred_region
      _
    $region9: #{tpu_custom_call.1} parent=1 // pred_fallthru
      _
    // Predicated region
    $region10: #{tpu_custom_call.1} parent=1 // pred_check
      _
    $region11: #{tpu_custom_call.1} parent=1 // pred_check_branch
      %20 = sbr.rel (0) target = $region13
    $region12: #{tpu_custom_call.1} parent=1 // pred_region
      _
    $region13: #{tpu_custom_call.1} parent=1 // pred_fallthru
      _
    // Predicated region
    $region14: #{tpu_custom_call.1} parent=1 // pred_check
      _
    $region15: #{tpu_custom_call.1} parent=1 // pred_check_branch
      %22 = sbr.rel (0) target = $region17
    $region16: #{tpu_custom_call.1} parent=1 // pred_region
      _
    $region17: #{tpu_custom_call.1} parent=1 // pred_fallthru
      _
    // Predicated region
    $region18: #{tpu_custom_call.1} parent=1 // pred_check
      _
    $region19: #{tpu_custom_call.1} parent=1 // pred_check_branch
      %24 = sbr.rel (0) target = $region21
    $region20: #{tpu_custom_call.1} parent=1 // pred_region
      _
    $region21: #{tpu_custom_call.1} parent=1 // pred_fallthru
      _
    // Predicated region
    $region22: #{tpu_custom_call.1} parent=1 // pred_check
      _
    $region23: #{tpu_custom_call.1} parent=1 // pred_check_branch
      %26 = sbr.rel (0) target = $region25
    $region24: #{tpu_custom_call.1} parent=1 // pred_region
      _
    $region25: #{tpu_custom_call.1} parent=1 // pred_fallthru
      _
    // Predicated region
    $region26: #{tpu_custom_call.1} parent=1 // pred_check
      _
    $region27: #{tpu_custom_call.1} parent=1 // pred_check_branch
      %28 = sbr.rel (0) target = $region29
    $region28: #{tpu_custom_call.1} parent=1 // pred_region
      _
    $region29: #{tpu_custom_call.1} parent=1 // pred_fallthru
      _
    // Predicated region
    $region30: #{tpu_custom_call.1} parent=1 // pred_check
      _
    $region31: #{tpu_custom_call.1} parent=1 // pred_check_branch
      %30 = sbr.rel (0) target = $region33
    $region32: #{tpu_custom_call.1} parent=1 // pred_region
      _
    $region33: #{tpu_custom_call.1} parent=1 // pred_fallthru
      _
    // Predicated region
    $region34: #{tpu_custom_call.1} parent=1 // pred_check
      _
    $region35: #{tpu_custom_call.1} parent=1 // pred_check_branch
      %32 = sbr.rel (0) target = $region37
    $region36: #{tpu_custom_call.1} parent=1 // pred_region
      _
    $region37: #{tpu_custom_call.1} parent=1 // pred_fallthru
      _
    %v34 = vld [vmem:[%s0] sm:$0xf]
    %v35 = vld [vmem:[%s0 + $0x4] sm:$0xf]
    %v36 = vld [vmem:[%s1] sm:$0xf]
    %v37 = vld [vmem:[%s1 + $0x4] sm:$0xf]
    %v38 = vld [vmem:[%s1 + $0x8] sm:$0xf]
    %v39 = vld [vmem:[%s1 + $0xc] sm:$0xf]
    %v40 = vld [vmem:[%s1 + $0x10] sm:$0xf]
    %v41 = vld [vmem:[%s1 + $0x14] sm:$0xf]
    %v42 = vld [vmem:[%s1 + $0x18] sm:$0xf]
    %v43 = vld [vmem:[%s1 + $0x1c] sm:$0xf]
    %v44 = vld [vmem:[%s1 + $0x20] sm:$0xf]
    %v45 = vld [vmem:[%s1 + $0x24] sm:$0xf]
    %v46 = vld [vmem:[%s1 + $0x28] sm:$0xf]
    %v47 = vld [vmem:[%s1 + $0x2c] sm:$0xf]
    %v48 = vld [vmem:[%s1 + $0x30] sm:$0xf]
    %v49 = vld [vmem:[%s1 + $0x34] sm:$0xf]
    %v50 = vld [vmem:[%s1 + $0x38] sm:$0xf]
    %v51 = vld [vmem:[%s1 + $0x3c] sm:$0xf]
    %v52 = vld [vmem:[%s1 + $0x40] sm:$0xf]
    %v53 = vld [vmem:[%s1 + $0x44] sm:$0xf]
    %v54 = vld [vmem:[%s1 + $0x48] sm:$0xf]
    %v55 = vld [vmem:[%s1 + $0x4c] sm:$0xf]
    %v56 = vld [vmem:[%s1 + $0x50] sm:$0xf]
    %v57 = vld [vmem:[%s1 + $0x54] sm:$0xf]
    %v58 = vld [vmem:[%s1 + $0x58] sm:$0xf]
    %v59 = vld [vmem:[%s1 + $0x5c] sm:$0xf]
    %v60 = vld [vmem:[%s1 + $0x60] sm:$0xf]
    %v61 = vld [vmem:[%s1 + $0x64] sm:$0xf]
    %v62 = vld [vmem:[%s1 + $0x68] sm:$0xf]
    %v63 = vld [vmem:[%s1 + $0x6c] sm:$0xf]
    %v64 = vld [vmem:[%s1 + $0x70] sm:$0xf]
    %v65 = vld [vmem:[%s1 + $0x74] sm:$0xf]
    %v66 = vld [vmem:[%s1 + $0x78] sm:$0xf]
    %v67 = vld [vmem:[%s1 + $0x7c] sm:$0xf]
    %v68 = vld [vmem:[%s2] sm:$0xff]
    %v69 = vld [vmem:[%s2 + $0x8] sm:$0xff]
    %v70 = vld [vmem:[%s2 + $0x10] sm:$0xff]
    %v71 = vld [vmem:[%s2 + $0x18] sm:$0xff]
    %v72 = vld [vmem:[%s2 + $0x20] sm:$0xff]
    %v73 = vld [vmem:[%s2 + $0x28] sm:$0xff]
    %v74 = vld [vmem:[%s2 + $0x30] sm:$0xff]
    %v75 = vld [vmem:[%s2 + $0x38] sm:$0xff]
    %v76 = vld [vmem:[%s2 + $0x40] sm:$0xff]
    %v77 = vld [vmem:[%s2 + $0x48] sm:$0xff]
    %v78 = vld [vmem:[%s2 + $0x50] sm:$0xff]
    %v79 = vld [vmem:[%s2 + $0x58] sm:$0xff]
    %v80 = vld [vmem:[%s2 + $0x60] sm:$0xff]
    %v81 = vld [vmem:[%s2 + $0x68] sm:$0xff]
    %v82 = vld [vmem:[%s2 + $0x70] sm:$0xff]
    %v83 = vld [vmem:[%s2 + $0x78] sm:$0xff]
    %v84 = vld [vmem:[%s2 + $0x80] sm:$0xff]
    %v85 = vld [vmem:[%s2 + $0x88] sm:$0xff]
    %v86 = vld [vmem:[%s2 + $0x90] sm:$0xff]
    %v87 = vld [vmem:[%s2 + $0x98] sm:$0xff]
    %v88 = vld [vmem:[%s2 + $0xa0] sm:$0xff]
    %v89 = vld [vmem:[%s2 + $0xa8] sm:$0xff]
    %v90 = vld [vmem:[%s2 + $0xb0] sm:$0xff]
    %v91 = vld [vmem:[%s2 + $0xb8] sm:$0xff]
    %v92 = vld [vmem:[%s2 + $0xc0] sm:$0xff]
    %v93 = vld [vmem:[%s2 + $0xc8] sm:$0xff]
    %v94 = vld [vmem:[%s2 + $0xd0] sm:$0xff]
    %v95 = vld [vmem:[%s2 + $0xd8] sm:$0xff]
    %v96 = vld [vmem:[%s2 + $0xe0] sm:$0xff]
    %v97 = vld [vmem:[%s2 + $0xe8] sm:$0xff]
    %v98 = vld [vmem:[%s2 + $0xf0] sm:$0xff]
    %v99 = vld [vmem:[%s2 + $0xf8] sm:$0xff]
    %101 = vset.pattern.permute.xlu0 0
    %102 = vperm.xlu0 %101, %v68
    %v103 = vpop.permute.xlu0 %102
    %106 = vset.pattern.permute.xlu0 0
    %107 = vperm.xlu0 %106, %v69
    %v108 = vpop.permute.xlu0 %107
    %111 = vset.pattern.permute.xlu0 0
    %112 = vperm.xlu0 %111, %v70
    %v113 = vpop.permute.xlu0 %112
    %116 = vset.pattern.permute.xlu0 0
    %117 = vperm.xlu0 %116, %v71
    %v118 = vpop.permute.xlu0 %117
    %121 = vset.pattern.permute.xlu0 0
    %122 = vperm.xlu0 %121, %v72
    %v123 = vpop.permute.xlu0 %122
    %126 = vset.pattern.permute.xlu0 0
    %127 = vperm.xlu0 %126, %v73
    %v128 = vpop.permute.xlu0 %127
    %131 = vset.pattern.permute.xlu0 0
    %132 = vperm.xlu0 %131, %v74
    %v133 = vpop.permute.xlu0 %132
    %136 = vset.pattern.permute.xlu0 0
    %137 = vperm.xlu0 %136, %v75
    %v138 = vpop.permute.xlu0 %137
    %141 = vset.pattern.permute.xlu0 0
    %142 = vperm.xlu0 %141, %v76
    %v143 = vpop.permute.xlu0 %142
    %146 = vset.pattern.permute.xlu0 0
    %147 = vperm.xlu0 %146, %v77
    %v148 = vpop.permute.xlu0 %147
    %151 = vset.pattern.permute.xlu0 0
    %152 = vperm.xlu0 %151, %v78
    %v153 = vpop.permute.xlu0 %152
    %156 = vset.pattern.permute.xlu0 0
    %157 = vperm.xlu0 %156, %v79
    %v158 = vpop.permute.xlu0 %157
    %161 = vset.pattern.permute.xlu0 0
    %162 = vperm.xlu0 %161, %v80
    %v163 = vpop.permute.xlu0 %162
    %166 = vset.pattern.permute.xlu0 0
    %167 = vperm.xlu0 %166, %v81
    %v168 = vpop.permute.xlu0 %167
    %171 = vset.pattern.permute.xlu0 0
    %172 = vperm.xlu0 %171, %v82
    %v173 = vpop.permute.xlu0 %172
    %176 = vset.pattern.permute.xlu0 0
    %177 = vperm.xlu0 %176, %v83
    %v178 = vpop.permute.xlu0 %177
    %181 = vset.pattern.permute.xlu0 0
    %182 = vperm.xlu0 %181, %v84
    %v183 = vpop.permute.xlu0 %182
    %186 = vset.pattern.permute.xlu0 0
    %187 = vperm.xlu0 %186, %v85
    %v188 = vpop.permute.xlu0 %187
    %191 = vset.pattern.permute.xlu0 0
    %192 = vperm.xlu0 %191, %v86
    %v193 = vpop.permute.xlu0 %192
    %196 = vset.pattern.permute.xlu0 0
    %197 = vperm.xlu0 %196, %v87
    %v198 = vpop.permute.xlu0 %197
    %201 = vset.pattern.permute.xlu0 0
    %202 = vperm.xlu0 %201, %v88
    %v203 = vpop.permute.xlu0 %202
    %206 = vset.pattern.permute.xlu0 0
    %207 = vperm.xlu0 %206, %v89
    %v208 = vpop.permute.xlu0 %207
    %211 = vset.pattern.permute.xlu0 0
    %212 = vperm.xlu0 %211, %v90
    %v213 = vpop.permute.xlu0 %212
    %216 = vset.pattern.permute.xlu0 0
    %217 = vperm.xlu0 %216, %v91
    %v218 = vpop.permute.xlu0 %217
    %221 = vset.pattern.permute.xlu0 0
    %222 = vperm.xlu0 %221, %v92
    %v223 = vpop.permute.xlu0 %222
    %226 = vset.pattern.permute.xlu0 0
    %227 = vperm.xlu0 %226, %v93
    %v228 = vpop.permute.xlu0 %227
    %231 = vset.pattern.permute.xlu0 0
    %232 = vperm.xlu0 %231, %v94
    %v233 = vpop.permute.xlu0 %232
    %236 = vset.pattern.permute.xlu0 0
    %237 = vperm.xlu0 %236, %v95
    %v238 = vpop.permute.xlu0 %237
    %241 = vset.pattern.permute.xlu0 0
    %242 = vperm.xlu0 %241, %v96
    %v243 = vpop.permute.xlu0 %242
    %246 = vset.pattern.permute.xlu0 0
    %247 = vperm.xlu0 %246, %v97
    %v248 = vpop.permute.xlu0 %247
    %251 = vset.pattern.permute.xlu0 0
    %252 = vperm.xlu0 %251, %v98
    %v253 = vpop.permute.xlu0 %252
    %256 = vset.pattern.permute.xlu0 0
    %257 = vperm.xlu0 %256, %v99
    %v258 = vpop.permute.xlu0 %257
    %v292 = vunpack.c.l.b16 %v36
    %v293 = vunpack.c.l.b16 %v37
    %v294 = vunpack.c.l.b16 %v38
    %v295 = vunpack.c.l.b16 %v39
    %v296 = vunpack.c.l.b16 %v40
    %v297 = vunpack.c.l.b16 %v41
    %v298 = vunpack.c.l.b16 %v42
    %v299 = vunpack.c.l.b16 %v43
    %v300 = vunpack.c.l.b16 %v44
    %v301 = vunpack.c.l.b16 %v45
    %v302 = vunpack.c.l.b16 %v46
    %v303 = vunpack.c.l.b16 %v47
    %v304 = vunpack.c.l.b16 %v48
    %v305 = vunpack.c.l.b16 %v49
    %v306 = vunpack.c.l.b16 %v50
    %v307 = vunpack.c.l.b16 %v51
    %v308 = vunpack.c.l.b16 %v52
    %v309 = vunpack.c.l.b16 %v53
    %v310 = vunpack.c.l.b16 %v54
    %v311 = vunpack.c.l.b16 %v55
    %v312 = vunpack.c.l.b16 %v56
    %v313 = vunpack.c.l.b16 %v57
    %v314 = vunpack.c.l.b16 %v58
    %v315 = vunpack.c.l.b16 %v59
    %v316 = vunpack.c.l.b16 %v60
    %v317 = vunpack.c.l.b16 %v61
    %v318 = vunpack.c.l.b16 %v62
    %v319 = vunpack.c.l.b16 %v63
    %v320 = vunpack.c.l.b16 %v64
    %v321 = vunpack.c.l.b16 %v65
    %v322 = vunpack.c.l.b16 %v66
    %v323 = vunpack.c.l.b16 %v67
    %v324 = vpack.c.b16 %v293, %v292
    %v325 = vpack.c.b16 %v295, %v294
    %v326 = vpack.c.b16 %v297, %v296
    %v327 = vpack.c.b16 %v299, %v298
    %v328 = vpack.c.b16 %v301, %v300
    %v329 = vpack.c.b16 %v303, %v302
    %v330 = vpack.c.b16 %v305, %v304
    %v331 = vpack.c.b16 %v307, %v306
    %v332 = vpack.c.b16 %v309, %v308
    %v333 = vpack.c.b16 %v311, %v310
    %v334 = vpack.c.b16 %v313, %v312
    %v335 = vpack.c.b16 %v315, %v314
    %v336 = vpack.c.b16 %v317, %v316
    %v337 = vpack.c.b16 %v319, %v318
    %v338 = vpack.c.b16 %v321, %v320
    %v339 = vpack.c.b16 %v323, %v322
    %v342 = vunpack.c.l.b16 %v34
    %v343 = vunpack.c.l.b16 %v35
    %v344 = vpack.c.b16 %v343, %v342
    %vm346 = vcmask 130048
    %v348 = vsel %vm346, %v324, 0
    %v351 = vsel %vm346, %v325, 0
    %v354 = vsel %vm346, %v326, 0
    %v357 = vsel %vm346, %v327, 0
    %v360 = vsel %vm346, %v328, 0
    %v363 = vsel %vm346, %v329, 0
    %v366 = vsel %vm346, %v330, 0
    %v369 = vsel %vm346, %v331, 0
    %v372 = vsel %vm346, %v332, 0
    %v375 = vsel %vm346, %v333, 0
    %v378 = vsel %vm346, %v334, 0
    %v381 = vsel %vm346, %v335, 0
    %v384 = vsel %vm346, %v336, 0
    %v387 = vsel %vm346, %v337, 0
    %v390 = vsel %vm346, %v338, 0
    %v393 = vsel %vm346, %v339, 0
    %395 = vmatprep.subr.bf16.mxu0 0
    %396 = vmatpush1.bf16.msra.mxu0 %v344
    %397 = vmatprep.subr.bf16.mxu0 0
    %398 = vmatpush1.bf16.msra.mxu0 0
    %399 = vmatprep.subr.bf16.mxu0 0
    %400 = vmatpush1.bf16.msra.mxu0 0
    %401 = vmatprep.subr.bf16.mxu0 0
    %402 = vmatpush1.bf16.msra.mxu0 0
    %403 = vmatprep.subr.bf16.mxu0 0
    %404 = vmatpush1.bf16.msra.mxu0 0
    %405 = vmatprep.subr.bf16.mxu0 0
    %406 = vmatpush1.bf16.msra.mxu0 0
    %407 = vmatprep.subr.bf16.mxu0 0
    %408 = vmatpush1.bf16.msra.mxu0 0
    %409 = vmatprep.subr.bf16.mxu0 0
    %410 = vmatpush1.bf16.msra.mxu0 0
    %411 = vmatprep.subr.bf16.mxu0 0
    %412 = vmatpush1.bf16.msra.mxu0 0
    %413 = vmatprep.subr.bf16.mxu0 0
    %414 = vmatpush1.bf16.msra.mxu0 0
    %415 = vmatprep.subr.bf16.mxu0 0
    %416 = vmatpush1.bf16.msra.mxu0 0
    %417 = vmatprep.subr.bf16.mxu0 0
    %418 = vmatpush1.bf16.msra.mxu0 0
    %419 = vmatprep.subr.bf16.mxu0 0
    %420 = vmatpush1.bf16.msra.mxu0 0
    %421 = vmatprep.subr.bf16.mxu0 0
    %422 = vmatpush1.bf16.msra.mxu0 0
    %423 = vmatprep.subr.bf16.mxu0 0
    %424 = vmatpush1.bf16.msra.mxu0 0
    %425 = vmatprep.subr.bf16.mxu0 0
    %426 = vmatpush1.bf16.msra.mxu0 0
    %427 = vmatprep.mubr.bf16.mxu0 0
    %428 = vmatmul.mubr.bf16.gmra.mrb[0].mxu0 %v348
    %v429 = vpop.f32.mrb[0].mxu0
    %v430 = vadd.f32 %v103, %v429
    %v431 = vpop.f32.mrb[0].mxu0
    %v432 = vpop.f32.mrb[0].mxu0
    %v433 = vadd.f32 %v108, %v432
    %v434 = vpop.f32.mrb[0].mxu0
    %435 = vmatprep.mubr.bf16.mxu0 0
    %436 = vmatmul.mubr.bf16.gmra.mrb[0].mxu0 %v351
    %v437 = vpop.f32.mrb[0].mxu0
    %v438 = vadd.f32 %v113, %v437
    %v439 = vpop.f32.mrb[0].mxu0
    %v440 = vpop.f32.mrb[0].mxu0
    %v441 = vadd.f32 %v118, %v440
    %v442 = vpop.f32.mrb[0].mxu0
    %443 = vmatprep.mubr.bf16.mxu0 0
    %444 = vmatmul.mubr.bf16.gmra.mrb[0].mxu0 %v354
    %v445 = vpop.f32.mrb[0].mxu0
    %v446 = vadd.f32 %v123, %v445
    %v447 = vpop.f32.mrb[0].mxu0
    %v448 = vpop.f32.mrb[0].mxu0
    %v449 = vadd.f32 %v128, %v448
    %v450 = vpop.f32.mrb[0].mxu0
    %451 = vmatprep.mubr.bf16.mxu0 0
    %452 = vmatmul.mubr.bf16.gmra.mrb[0].mxu0 %v357
    %v453 = vpop.f32.mrb[0].mxu0
    %v454 = vadd.f32 %v133, %v453
    %v455 = vpop.f32.mrb[0].mxu0
    %v456 = vpop.f32.mrb[0].mxu0
    %v457 = vadd.f32 %v138, %v456
    %v458 = vpop.f32.mrb[0].mxu0
    %459 = vmatprep.mubr.bf16.mxu0 0
    %460 = vmatmul.mubr.bf16.gmra.mrb[0].mxu0 %v360
    %v461 = vpop.f32.mrb[0].mxu0
    %v462 = vadd.f32 %v143, %v461
    %v463 = vpop.f32.mrb[0].mxu0
    %v464 = vpop.f32.mrb[0].mxu0
    %v465 = vadd.f32 %v148, %v464
    %v466 = vpop.f32.mrb[0].mxu0
    %467 = vmatprep.mubr.bf16.mxu0 0
    %468 = vmatmul.mubr.bf16.gmra.mrb[0].mxu0 %v363
    %v469 = vpop.f32.mrb[0].mxu0
    %v470 = vadd.f32 %v153, %v469
    %v471 = vpop.f32.mrb[0].mxu0
    %v472 = vpop.f32.mrb[0].mxu0
    %v473 = vadd.f32 %v158, %v472
    %v474 = vpop.f32.mrb[0].mxu0
    %475 = vmatprep.mubr.bf16.mxu0 0
    %476 = vmatmul.mubr.bf16.gmra.mrb[0].mxu0 %v366
    %v477 = vpop.f32.mrb[0].mxu0
    %v478 = vadd.f32 %v163, %v477
    %v479 = vpop.f32.mrb[0].mxu0
    %v480 = vpop.f32.mrb[0].mxu0
    %v481 = vadd.f32 %v168, %v480
    %v482 = vpop.f32.mrb[0].mxu0
    %483 = vmatprep.mubr.bf16.mxu0 0
    %484 = vmatmul.mubr.bf16.gmra.mrb[0].mxu0 %v369
    %v485 = vpop.f32.mrb[0].mxu0
    %v486 = vadd.f32 %v173, %v485
    %v487 = vpop.f32.mrb[0].mxu0
    %v488 = vpop.f32.mrb[0].mxu0
    %v489 = vadd.f32 %v178, %v488
    %v490 = vpop.f32.mrb[0].mxu0
    %491 = vmatprep.mubr.bf16.mxu0 0
    %492 = vmatmul.mubr.bf16.gmra.mrb[0].mxu0 %v372
    %v493 = vpop.f32.mrb[0].mxu0
    %v494 = vadd.f32 %v183, %v493
    %v495 = vpop.f32.mrb[0].mxu0
    %v496 = vpop.f32.mrb[0].mxu0
    %v497 = vadd.f32 %v188, %v496
    %v498 = vpop.f32.mrb[0].mxu0
    %499 = vmatprep.mubr.bf16.mxu0 0
    %500 = vmatmul.mubr.bf16.gmra.mrb[0].mxu0 %v375
    %v501 = vpop.f32.mrb[0].mxu0
    %v502 = vadd.f32 %v193, %v501
    %v503 = vpop.f32.mrb[0].mxu0
    %v504 = vpop.f32.mrb[0].mxu0
    %v505 = vadd.f32 %v198, %v504
    %v506 = vpop.f32.mrb[0].mxu0
    %507 = vmatprep.mubr.bf16.mxu0 0
    %508 = vmatmul.mubr.bf16.gmra.mrb[0].mxu0 %v378
    %v509 = vpop.f32.mrb[0].mxu0
    %v510 = vadd.f32 %v203, %v509
    %v511 = vpop.f32.mrb[0].mxu0
    %v512 = vpop.f32.mrb[0].mxu0
    %v513 = vadd.f32 %v208, %v512
    %v514 = vpop.f32.mrb[0].mxu0
    %515 = vmatprep.mubr.bf16.mxu0 0
    %516 = vmatmul.mubr.bf16.gmra.mrb[0].mxu0 %v381
    %v517 = vpop.f32.mrb[0].mxu0
    %v518 = vadd.f32 %v213, %v517
    %v519 = vpop.f32.mrb[0].mxu0
    %v520 = vpop.f32.mrb[0].mxu0
    %v521 = vadd.f32 %v218, %v520
    %v522 = vpop.f32.mrb[0].mxu0
    %523 = vmatprep.mubr.bf16.mxu0 0
    %524 = vmatmul.mubr.bf16.gmra.mrb[0].mxu0 %v384
    %v525 = vpop.f32.mrb[0].mxu0
    %v526 = vadd.f32 %v223, %v525
    %v527 = vpop.f32.mrb[0].mxu0
    %v528 = vpop.f32.mrb[0].mxu0
    %v529 = vadd.f32 %v228, %v528
    %v530 = vpop.f32.mrb[0].mxu0
    %531 = vmatprep.mubr.bf16.mxu0 0
    %532 = vmatmul.mubr.bf16.gmra.mrb[0].mxu0 %v387
    %v533 = vpop.f32.mrb[0].mxu0
    %v534 = vadd.f32 %v233, %v533
    %v535 = vpop.f32.mrb[0].mxu0
    %v536 = vpop.f32.mrb[0].mxu0
    %v537 = vadd.f32 %v238, %v536
    %v538 = vpop.f32.mrb[0].mxu0
    %539 = vmatprep.mubr.bf16.mxu0 0
    %540 = vmatmul.mubr.bf16.gmra.mrb[0].mxu0 %v390
    %v541 = vpop.f32.mrb[0].mxu0
    %v542 = vadd.f32 %v243, %v541
    %v543 = vpop.f32.mrb[0].mxu0
    %v544 = vpop.f32.mrb[0].mxu0
    %v545 = vadd.f32 %v248, %v544
    %v546 = vpop.f32.mrb[0].mxu0
    %547 = vmatprep.mubr.bf16.mxu0 0
    %548 = vmatmul.mubr.bf16.gmra.mrb[0].mxu0 %v393
    %v549 = vpop.f32.mrb[0].mxu0
    %v550 = vadd.f32 %v253, %v549
    %v551 = vpop.f32.mrb[0].mxu0
    %v552 = vpop.f32.mrb[0].mxu0
    %v553 = vadd.f32 %v258, %v552
    %v554 = vpop.f32.mrb[0].mxu0
    %555 = vdwg.mxu0
    %v556 = vmax.f32 %v430, 0.0
    %v557 = vmax.f32 %v433, 0.0
    %v558 = vmax.f32 %v438, 0.0
    %v559 = vmax.f32 %v441, 0.0
    %v560 = vmax.f32 %v446, 0.0
    %v561 = vmax.f32 %v449, 0.0
    %v562 = vmax.f32 %v454, 0.0
    %v563 = vmax.f32 %v457, 0.0
    %v564 = vmax.f32 %v462, 0.0
    %v565 = vmax.f32 %v465, 0.0
    %v566 = vmax.f32 %v470, 0.0
    %v567 = vmax.f32 %v473, 0.0
    %v568 = vmax.f32 %v478, 0.0
    %v569 = vmax.f32 %v481, 0.0
    %v570 = vmax.f32 %v486, 0.0
    %v571 = vmax.f32 %v489, 0.0
    %v572 = vmax.f32 %v494, 0.0
    %v573 = vmax.f32 %v497, 0.0
    %v574 = vmax.f32 %v502, 0.0
    %v575 = vmax.f32 %v505, 0.0
    %v576 = vmax.f32 %v510, 0.0
    %v577 = vmax.f32 %v513, 0.0
    %v578 = vmax.f32 %v518, 0.0
    %v579 = vmax.f32 %v521, 0.0
    %v580 = vmax.f32 %v526, 0.0
    %v581 = vmax.f32 %v529, 0.0
    %v582 = vmax.f32 %v534, 0.0
    %v583 = vmax.f32 %v537, 0.0
    %v584 = vmax.f32 %v542, 0.0
    %v585 = vmax.f32 %v545, 0.0
    %v586 = vmax.f32 %v550, 0.0
    %v587 = vmax.f32 %v553, 0.0
    %v588 = vld [vmem:[%s3] sm:$0xff]
    %v589 = vld [vmem:[%s3 + $0x8] sm:$0xff]
    %v590 = vld [vmem:[%s3 + $0x10] sm:$0xff]
    %v591 = vld [vmem:[%s3 + $0x18] sm:$0xff]
    %v592 = vld [vmem:[%s3 + $0x20] sm:$0xff]
    %v593 = vld [vmem:[%s3 + $0x28] sm:$0xff]
    %v594 = vld [vmem:[%s3 + $0x30] sm:$0xff]
    %v595 = vld [vmem:[%s3 + $0x38] sm:$0xff]
    %v596 = vld [vmem:[%s3 + $0x40] sm:$0xff]
    %v597 = vld [vmem:[%s3 + $0x48] sm:$0xff]
    %v598 = vld [vmem:[%s3 + $0x50] sm:$0xff]
    %v599 = vld [vmem:[%s3 + $0x58] sm:$0xff]
    %v600 = vld [vmem:[%s3 + $0x60] sm:$0xff]
    %v601 = vld [vmem:[%s3 + $0x68] sm:$0xff]
    %v602 = vld [vmem:[%s3 + $0x70] sm:$0xff]
    %v603 = vld [vmem:[%s3 + $0x78] sm:$0xff]
    %v604 = vld [vmem:[%s3 + $0x80] sm:$0xff]
    %v605 = vld [vmem:[%s3 + $0x88] sm:$0xff]
    %v606 = vld [vmem:[%s3 + $0x90] sm:$0xff]
    %v607 = vld [vmem:[%s3 + $0x98] sm:$0xff]
    %v608 = vld [vmem:[%s3 + $0xa0] sm:$0xff]
    %v609 = vld [vmem:[%s3 + $0xa8] sm:$0xff]
    %v610 = vld [vmem:[%s3 + $0xb0] sm:$0xff]
    %v611 = vld [vmem:[%s3 + $0xb8] sm:$0xff]
    %v612 = vld [vmem:[%s3 + $0xc0] sm:$0xff]
    %v613 = vld [vmem:[%s3 + $0xc8] sm:$0xff]
    %v614 = vld [vmem:[%s3 + $0xd0] sm:$0xff]
    %v615 = vld [vmem:[%s3 + $0xd8] sm:$0xff]
    %v616 = vld [vmem:[%s3 + $0xe0] sm:$0xff]
    %v617 = vld [vmem:[%s3 + $0xe8] sm:$0xff]
    %v618 = vld [vmem:[%s3 + $0xf0] sm:$0xff]
    %v619 = vld [vmem:[%s3 + $0xf8] sm:$0xff]
    %v620 = vpack.c.bf16 %v557, %v556
    %v621 = vpack.c.bf16 %v559, %v558
    %v622 = vpack.c.bf16 %v561, %v560
    %v623 = vpack.c.bf16 %v563, %v562
    %v624 = vpack.c.bf16 %v565, %v564
    %v625 = vpack.c.bf16 %v567, %v566
    %v626 = vpack.c.bf16 %v569, %v568
    %v627 = vpack.c.bf16 %v571, %v570
    %v628 = vpack.c.bf16 %v573, %v572
    %v629 = vpack.c.bf16 %v575, %v574
    %v630 = vpack.c.bf16 %v577, %v576
    %v631 = vpack.c.bf16 %v579, %v578
    %v632 = vpack.c.bf16 %v581, %v580
    %v633 = vpack.c.bf16 %v583, %v582
    %v634 = vpack.c.bf16 %v585, %v584
    %v635 = vpack.c.bf16 %v587, %v586
    %v636 = vld [vmem:[%s4] sm:$0xff]
    %v637 = vld [vmem:[%s4 + $0x8] sm:$0xff]
    %v638 = vld [vmem:[%s4 + $0x10] sm:$0xff]
    %v639 = vld [vmem:[%s4 + $0x18] sm:$0xff]
    %v640 = vld [vmem:[%s4 + $0x20] sm:$0xff]
    %v641 = vld [vmem:[%s4 + $0x28] sm:$0xff]
    %v642 = vld [vmem:[%s4 + $0x30] sm:$0xff]
    %v643 = vld [vmem:[%s4 + $0x38] sm:$0xff]
    %v644 = vld [vmem:[%s4 + $0x40] sm:$0xff]
    %v645 = vld [vmem:[%s4 + $0x48] sm:$0xff]
    %v646 = vld [vmem:[%s4 + $0x50] sm:$0xff]
    %v647 = vld [vmem:[%s4 + $0x58] sm:$0xff]
    %v648 = vld [vmem:[%s4 + $0x60] sm:$0xff]
    %v649 = vld [vmem:[%s4 + $0x68] sm:$0xff]
    %v650 = vld [vmem:[%s4 + $0x70] sm:$0xff]
    %v651 = vld [vmem:[%s4 + $0x78] sm:$0xff]
    %v652 = vld [vmem:[%s4 + $0x80] sm:$0xff]
    %v653 = vld [vmem:[%s4 + $0x88] sm:$0xff]
    %v654 = vld [vmem:[%s4 + $0x90] sm:$0xff]
    %v655 = vld [vmem:[%s4 + $0x98] sm:$0xff]
    %v656 = vld [vmem:[%s4 + $0xa0] sm:$0xff]
    %v657 = vld [vmem:[%s4 + $0xa8] sm:$0xff]
    %v658 = vld [vmem:[%s4 + $0xb0] sm:$0xff]
    %v659 = vld [vmem:[%s4 + $0xb8] sm:$0xff]
    %v660 = vld [vmem:[%s4 + $0xc0] sm:$0xff]
    %v661 = vld [vmem:[%s4 + $0xc8] sm:$0xff]
    %v662 = vld [vmem:[%s4 + $0xd0] sm:$0xff]
    %v663 = vld [vmem:[%s4 + $0xd8] sm:$0xff]
    %v664 = vld [vmem:[%s4 + $0xe0] sm:$0xff]
    %v665 = vld [vmem:[%s4 + $0xe8] sm:$0xff]
    %v666 = vld [vmem:[%s4 + $0xf0] sm:$0xff]
    %v667 = vld [vmem:[%s4 + $0xf8] sm:$0xff]
    %669 = vset.pattern.permute.xlu0 0
    %670 = vperm.xlu0 %669, %v636
    %v671 = vpop.permute.xlu0 %670
    %674 = vset.pattern.permute.xlu0 0
    %675 = vperm.xlu0 %674, %v637
    %v676 = vpop.permute.xlu0 %675
    %679 = vset.pattern.permute.xlu0 0
    %680 = vperm.xlu0 %679, %v638
    %v681 = vpop.permute.xlu0 %680
    %684 = vset.pattern.permute.xlu0 0
    %685 = vperm.xlu0 %684, %v639
    %v686 = vpop.permute.xlu0 %685
    %689 = vset.pattern.permute.xlu0 0
    %690 = vperm.xlu0 %689, %v640
    %v691 = vpop.permute.xlu0 %690
    %694 = vset.pattern.permute.xlu0 0
    %695 = vperm.xlu0 %694, %v641
    %v696 = vpop.permute.xlu0 %695
    %699 = vset.pattern.permute.xlu0 0
    %700 = vperm.xlu0 %699, %v642
    %v701 = vpop.permute.xlu0 %700
    %704 = vset.pattern.permute.xlu0 0
    %705 = vperm.xlu0 %704, %v643
    %v706 = vpop.permute.xlu0 %705
    %709 = vset.pattern.permute.xlu0 0
    %710 = vperm.xlu0 %709, %v644
    %v711 = vpop.permute.xlu0 %710
    %714 = vset.pattern.permute.xlu0 0
    %715 = vperm.xlu0 %714, %v645
    %v716 = vpop.permute.xlu0 %715
    %719 = vset.pattern.permute.xlu0 0
    %720 = vperm.xlu0 %719, %v646
    %v721 = vpop.permute.xlu0 %720
    %724 = vset.pattern.permute.xlu0 0
    %725 = vperm.xlu0 %724, %v647
    %v726 = vpop.permute.xlu0 %725
    %729 = vset.pattern.permute.xlu0 0
    %730 = vperm.xlu0 %729, %v648
    %v731 = vpop.permute.xlu0 %730
    %734 = vset.pattern.permute.xlu0 0
    %735 = vperm.xlu0 %734, %v649
    %v736 = vpop.permute.xlu0 %735
    %739 = vset.pattern.permute.xlu0 0
    %740 = vperm.xlu0 %739, %v650
    %v741 = vpop.permute.xlu0 %740
    %744 = vset.pattern.permute.xlu0 0
    %745 = vperm.xlu0 %744, %v651
    %v746 = vpop.permute.xlu0 %745
    %749 = vset.pattern.permute.xlu0 0
    %750 = vperm.xlu0 %749, %v652
    %v751 = vpop.permute.xlu0 %750
    %754 = vset.pattern.permute.xlu0 0
    %755 = vperm.xlu0 %754, %v653
    %v756 = vpop.permute.xlu0 %755
    %759 = vset.pattern.permute.xlu0 0
    %760 = vperm.xlu0 %759, %v654
    %v761 = vpop.permute.xlu0 %760
    %764 = vset.pattern.permute.xlu0 0
    %765 = vperm.xlu0 %764, %v655
    %v766 = vpop.permute.xlu0 %765
    %769 = vset.pattern.permute.xlu0 0
    %770 = vperm.xlu0 %769, %v656
    %v771 = vpop.permute.xlu0 %770
    %774 = vset.pattern.permute.xlu0 0
    %775 = vperm.xlu0 %774, %v657
    %v776 = vpop.permute.xlu0 %775
    %779 = vset.pattern.permute.xlu0 0
    %780 = vperm.xlu0 %779, %v658
    %v781 = vpop.permute.xlu0 %780
    %784 = vset.pattern.permute.xlu0 0
    %785 = vperm.xlu0 %784, %v659
    %v786 = vpop.permute.xlu0 %785
    %789 = vset.pattern.permute.xlu0 0
    %790 = vperm.xlu0 %789, %v660
    %v791 = vpop.permute.xlu0 %790
    %794 = vset.pattern.permute.xlu0 0
    %795 = vperm.xlu0 %794, %v661
    %v796 = vpop.permute.xlu0 %795
    %799 = vset.pattern.permute.xlu0 0
    %800 = vperm.xlu0 %799, %v662
    %v801 = vpop.permute.xlu0 %800
    %804 = vset.pattern.permute.xlu0 0
    %805 = vperm.xlu0 %804, %v663
    %v806 = vpop.permute.xlu0 %805
    %809 = vset.pattern.permute.xlu0 0
    %810 = vperm.xlu0 %809, %v664
    %v811 = vpop.permute.xlu0 %810
    %814 = vset.pattern.permute.xlu0 0
    %815 = vperm.xlu0 %814, %v665
    %v816 = vpop.permute.xlu0 %815
    %819 = vset.pattern.permute.xlu0 0
    %820 = vperm.xlu0 %819, %v666
    %v821 = vpop.permute.xlu0 %820
    %824 = vset.pattern.permute.xlu0 0
    %825 = vperm.xlu0 %824, %v667
    %v826 = vpop.permute.xlu0 %825
    %v860 = vunpack.c.l.b16 %v588
    %v861 = vunpack.c.h.b16 %v588
    %v862 = vunpack.c.l.b16 %v589
    %v863 = vunpack.c.h.b16 %v589
    %v864 = vunpack.c.l.b16 %v590
    %v865 = vunpack.c.h.b16 %v590
    %v866 = vunpack.c.l.b16 %v591
    %v867 = vunpack.c.h.b16 %v591
    %v868 = vunpack.c.l.b16 %v592
    %v869 = vunpack.c.h.b16 %v592
    %v870 = vunpack.c.l.b16 %v593
    %v871 = vunpack.c.h.b16 %v593
    %v872 = vunpack.c.l.b16 %v594
    %v873 = vunpack.c.h.b16 %v594
    %v874 = vunpack.c.l.b16 %v595
    %v875 = vunpack.c.h.b16 %v595
    %v876 = vunpack.c.l.b16 %v596
    %v877 = vunpack.c.h.b16 %v596
    %v878 = vunpack.c.l.b16 %v597
    %v879 = vunpack.c.h.b16 %v597
    %v880 = vunpack.c.l.b16 %v598
    %v881 = vunpack.c.h.b16 %v598
    %v882 = vunpack.c.l.b16 %v599
    %v883 = vunpack.c.h.b16 %v599
    %v884 = vunpack.c.l.b16 %v600
    %v885 = vunpack.c.h.b16 %v600
    %v886 = vunpack.c.l.b16 %v601
    %v887 = vunpack.c.h.b16 %v601
    %v888 = vunpack.c.l.b16 %v602
    %v889 = vunpack.c.h.b16 %v602
    %v890 = vunpack.c.l.b16 %v603
    %v891 = vunpack.c.h.b16 %v603
    %v892 = vunpack.c.l.b16 %v604
    %v893 = vunpack.c.h.b16 %v604
    %v894 = vunpack.c.l.b16 %v605
    %v895 = vunpack.c.h.b16 %v605
    %v896 = vunpack.c.l.b16 %v606
    %v897 = vunpack.c.h.b16 %v606
    %v898 = vunpack.c.l.b16 %v607
    %v899 = vunpack.c.h.b16 %v607
    %v900 = vunpack.c.l.b16 %v608
    %v901 = vunpack.c.h.b16 %v608
    %v902 = vunpack.c.l.b16 %v609
    %v903 = vunpack.c.h.b16 %v609
    %v904 = vunpack.c.l.b16 %v610
    %v905 = vunpack.c.h.b16 %v610
    %v906 = vunpack.c.l.b16 %v611
    %v907 = vunpack.c.h.b16 %v611
    %v908 = vunpack.c.l.b16 %v612
    %v909 = vunpack.c.h.b16 %v612
    %v910 = vunpack.c.l.b16 %v613
    %v911 = vunpack.c.h.b16 %v613
    %v912 = vunpack.c.l.b16 %v614
    %v913 = vunpack.c.h.b16 %v614
    %v914 = vunpack.c.l.b16 %v615
    %v915 = vunpack.c.h.b16 %v615
    %v916 = vunpack.c.l.b16 %v616
    %v917 = vunpack.c.h.b16 %v616
    %v918 = vunpack.c.l.b16 %v617
    %v919 = vunpack.c.h.b16 %v617
    %v920 = vunpack.c.l.b16 %v618
    %v921 = vunpack.c.h.b16 %v618
    %v922 = vunpack.c.l.b16 %v619
    %v923 = vunpack.c.h.b16 %v619
    %v924 = vpack.c.b16 %v862, %v860
    %v925 = vpack.c.b16 %v863, %v861
    %v926 = vpack.c.b16 %v866, %v864
    %v927 = vpack.c.b16 %v867, %v865
    %v928 = vpack.c.b16 %v870, %v868
    %v929 = vpack.c.b16 %v871, %v869
    %v930 = vpack.c.b16 %v874, %v872
    %v931 = vpack.c.b16 %v875, %v873
    %v932 = vpack.c.b16 %v878, %v876
    %v933 = vpack.c.b16 %v879, %v877
    %v934 = vpack.c.b16 %v882, %v880
    %v935 = vpack.c.b16 %v883, %v881
    %v936 = vpack.c.b16 %v886, %v884
    %v937 = vpack.c.b16 %v887, %v885
    %v938 = vpack.c.b16 %v890, %v888
    %v939 = vpack.c.b16 %v891, %v889
    %v940 = vpack.c.b16 %v894, %v892
    %v941 = vpack.c.b16 %v895, %v893
    %v942 = vpack.c.b16 %v898, %v896
    %v943 = vpack.c.b16 %v899, %v897
    %v944 = vpack.c.b16 %v902, %v900
    %v945 = vpack.c.b16 %v903, %v901
    %v946 = vpack.c.b16 %v906, %v904
    %v947 = vpack.c.b16 %v907, %v905
    %v948 = vpack.c.b16 %v910, %v908
    %v949 = vpack.c.b16 %v911, %v909
    %v950 = vpack.c.b16 %v914, %v912
    %v951 = vpack.c.b16 %v915, %v913
    %v952 = vpack.c.b16 %v918, %v916
    %v953 = vpack.c.b16 %v919, %v917
    %v954 = vpack.c.b16 %v922, %v920
    %v955 = vpack.c.b16 %v923, %v921
    %988 = vmatprep.subr.bf16.mxu0 0
    %989 = vmatpush1.bf16.msra.mxu0 %v620
    %990 = vmatprep.subr.bf16.mxu0 0
    %991 = vmatpush1.bf16.msra.mxu0 %v621
    %992 = vmatprep.subr.bf16.mxu0 0
    %993 = vmatpush1.bf16.msra.mxu0 %v622
    %994 = vmatprep.subr.bf16.mxu0 0
    %995 = vmatpush1.bf16.msra.mxu0 %v623
    %996 = vmatprep.subr.bf16.mxu0 0
    %997 = vmatpush1.bf16.msra.mxu0 %v624
    %998 = vmatprep.subr.bf16.mxu0 0
    %999 = vmatpush1.bf16.msra.mxu0 %v625
    %1000 = vmatprep.subr.bf16.mxu0 0
    %1001 = vmatpush1.bf16.msra.mxu0 %v626
    %1002 = vmatprep.subr.bf16.mxu0 0
    %1003 = vmatpush1.bf16.msra.mxu0 %v627
    %1004 = vmatprep.subr.bf16.mxu0 0
    %1005 = vmatpush1.bf16.msra.mxu0 %v628
    %1006 = vmatprep.subr.bf16.mxu0 0
    %1007 = vmatpush1.bf16.msra.mxu0 %v629
    %1008 = vmatprep.subr.bf16.mxu0 0
    %1009 = vmatpush1.bf16.msra.mxu0 %v630
    %1010 = vmatprep.subr.bf16.mxu0 0
    %1011 = vmatpush1.bf16.msra.mxu0 %v631
    %1012 = vmatprep.subr.bf16.mxu0 0
    %1013 = vmatpush1.bf16.msra.mxu0 %v632
    %1014 = vmatprep.subr.bf16.mxu0 0
    %1015 = vmatpush1.bf16.msra.mxu0 %v633
    %1016 = vmatprep.subr.bf16.mxu0 0
    %1017 = vmatpush1.bf16.msra.mxu0 %v634
    %1018 = vmatprep.subr.bf16.mxu0 0
    %1019 = vmatpush1.bf16.msra.mxu0 %v635
    %1020 = vmatprep.mubr.bf16.mxu0 %v925
    %1021 = vmatmul.mubr.bf16.gmra.mrb[0].mxu0 %v924
    %v1022 = vpop.f32.mrb[0].mxu0
    %v1023 = vadd.f32 %v671, %v1022
    %v1024 = vpop.f32.mrb[0].mxu0
    %v1025 = vpop.f32.mrb[0].mxu0
    %v1026 = vadd.f32 %v676, %v1025
    %v1027 = vpop.f32.mrb[0].mxu0
    %1028 = vmatprep.mubr.bf16.mxu0 %v927
    %1029 = vmatmul.mubr.bf16.gmra.mrb[0].mxu0 %v926
    %v1030 = vpop.f32.mrb[0].mxu0
    %v1031 = vadd.f32 %v681, %v1030
    %v1032 = vpop.f32.mrb[0].mxu0
    %v1033 = vpop.f32.mrb[0].mxu0
    %v1034 = vadd.f32 %v686, %v1033
    %v1035 = vpop.f32.mrb[0].mxu0
    %1036 = vmatprep.mubr.bf16.mxu0 %v929
    %1037 = vmatmul.mubr.bf16.gmra.mrb[0].mxu0 %v928
    %v1038 = vpop.f32.mrb[0].mxu0
    %v1039 = vadd.f32 %v691, %v1038
    %v1040 = vpop.f32.mrb[0].mxu0
    %v1041 = vpop.f32.mrb[0].mxu0
    %v1042 = vadd.f32 %v696, %v1041
    %v1043 = vpop.f32.mrb[0].mxu0
    %1044 = vmatprep.mubr.bf16.mxu0 %v931
    %1045 = vmatmul.mubr.bf16.gmra.mrb[0].mxu0 %v930
    %v1046 = vpop.f32.mrb[0].mxu0
    %v1047 = vadd.f32 %v701, %v1046
    %v1048 = vpop.f32.mrb[0].mxu0
    %v1049 = vpop.f32.mrb[0].mxu0
    %v1050 = vadd.f32 %v706, %v1049
    %v1051 = vpop.f32.mrb[0].mxu0
    %1052 = vmatprep.mubr.bf16.mxu0 %v933
    %1053 = vmatmul.mubr.bf16.gmra.mrb[0].mxu0 %v932
    %v1054 = vpop.f32.mrb[0].mxu0
    %v1055 = vadd.f32 %v711, %v1054
    %v1056 = vpop.f32.mrb[0].mxu0
    %v1057 = vpop.f32.mrb[0].mxu0
    %v1058 = vadd.f32 %v716, %v1057
    %v1059 = vpop.f32.mrb[0].mxu0
    %1060 = vmatprep.mubr.bf16.mxu0 %v935
    %1061 = vmatmul.mubr.bf16.gmra.mrb[0].mxu0 %v934
    %v1062 = vpop.f32.mrb[0].mxu0
    %v1063 = vadd.f32 %v721, %v1062
    %v1064 = vpop.f32.mrb[0].mxu0
    %v1065 = vpop.f32.mrb[0].mxu0
    %v1066 = vadd.f32 %v726, %v1065
    %v1067 = vpop.f32.mrb[0].mxu0
    %1068 = vmatprep.mubr.bf16.mxu0 %v937
    %1069 = vmatmul.mubr.bf16.gmra.mrb[0].mxu0 %v936
    %v1070 = vpop.f32.mrb[0].mxu0
    %v1071 = vadd.f32 %v731, %v1070
    %v1072 = vpop.f32.mrb[0].mxu0
    %v1073 = vpop.f32.mrb[0].mxu0
    %v1074 = vadd.f32 %v736, %v1073
    %v1075 = vpop.f32.mrb[0].mxu0
    %1076 = vmatprep.mubr.bf16.mxu0 %v939
    %1077 = vmatmul.mubr.bf16.gmra.mrb[0].mxu0 %v938
    %v1078 = vpop.f32.mrb[0].mxu0
    %v1079 = vadd.f32 %v741, %v1078
    %v1080 = vpop.f32.mrb[0].mxu0
    %v1081 = vpop.f32.mrb[0].mxu0
    %v1082 = vadd.f32 %v746, %v1081
    %v1083 = vpop.f32.mrb[0].mxu0
    %1084 = vmatprep.mubr.bf16.mxu0 %v941
    %1085 = vmatmul.mubr.bf16.gmra.mrb[0].mxu0 %v940
    %v1086 = vpop.f32.mrb[0].mxu0
    %v1087 = vadd.f32 %v751, %v1086
    %v1088 = vpop.f32.mrb[0].mxu0
    %v1089 = vpop.f32.mrb[0].mxu0
    %v1090 = vadd.f32 %v756, %v1089
    %v1091 = vpop.f32.mrb[0].mxu0
    %1092 = vmatprep.mubr.bf16.mxu0 %v943
    %1093 = vmatmul.mubr.bf16.gmra.mrb[0].mxu0 %v942
    %v1094 = vpop.f32.mrb[0].mxu0
    %v1095 = vadd.f32 %v761, %v1094
    %v1096 = vpop.f32.mrb[0].mxu0
    %v1097 = vpop.f32.mrb[0].mxu0
    %v1098 = vadd.f32 %v766, %v1097
    %v1099 = vpop.f32.mrb[0].mxu0
    %1100 = vmatprep.mubr.bf16.mxu0 %v945
    %1101 = vmatmul.mubr.bf16.gmra.mrb[0].mxu0 %v944
    %v1102 = vpop.f32.mrb[0].mxu0
    %v1103 = vadd.f32 %v771, %v1102
    %v1104 = vpop.f32.mrb[0].mxu0
    %v1105 = vpop.f32.mrb[0].mxu0
    %v1106 = vadd.f32 %v776, %v1105
    %v1107 = vpop.f32.mrb[0].mxu0
    %1108 = vmatprep.mubr.bf16.mxu0 %v947
    %1109 = vmatmul.mubr.bf16.gmra.mrb[0].mxu0 %v946
    %v1110 = vpop.f32.mrb[0].mxu0
    %v1111 = vadd.f32 %v781, %v1110
    %v1112 = vpop.f32.mrb[0].mxu0
    %v1113 = vpop.f32.mrb[0].mxu0
    %v1114 = vadd.f32 %v786, %v1113
    %v1115 = vpop.f32.mrb[0].mxu0
    %1116 = vmatprep.mubr.bf16.mxu0 %v949
    %1117 = vmatmul.mubr.bf16.gmra.mrb[0].mxu0 %v948
    %v1118 = vpop.f32.mrb[0].mxu0
    %v1119 = vadd.f32 %v791, %v1118
    %v1120 = vpop.f32.mrb[0].mxu0
    %v1121 = vpop.f32.mrb[0].mxu0
    %v1122 = vadd.f32 %v796, %v1121
    %v1123 = vpop.f32.mrb[0].mxu0
    %1124 = vmatprep.mubr.bf16.mxu0 %v951
    %1125 = vmatmul.mubr.bf16.gmra.mrb[0].mxu0 %v950
    %v1126 = vpop.f32.mrb[0].mxu0
    %v1127 = vadd.f32 %v801, %v1126
    %v1128 = vpop.f32.mrb[0].mxu0
    %v1129 = vpop.f32.mrb[0].mxu0
    %v1130 = vadd.f32 %v806, %v1129
    %v1131 = vpop.f32.mrb[0].mxu0
    %1132 = vmatprep.mubr.bf16.mxu0 %v953
    %1133 = vmatmul.mubr.bf16.gmra.mrb[0].mxu0 %v952
    %v1134 = vpop.f32.mrb[0].mxu0
    %v1135 = vadd.f32 %v811, %v1134
    %v1136 = vpop.f32.mrb[0].mxu0
    %v1137 = vpop.f32.mrb[0].mxu0
    %v1138 = vadd.f32 %v816, %v1137
    %v1139 = vpop.f32.mrb[0].mxu0
    %1140 = vmatprep.mubr.bf16.mxu0 %v955
    %1141 = vmatmul.mubr.bf16.gmra.mrb[0].mxu0 %v954
    %v1142 = vpop.f32.mrb[0].mxu0
    %v1143 = vadd.f32 %v821, %v1142
    %v1144 = vpop.f32.mrb[0].mxu0
    %v1145 = vpop.f32.mrb[0].mxu0
    %v1146 = vadd.f32 %v826, %v1145
    %v1147 = vpop.f32.mrb[0].mxu0
    %1148 = vdwg.mxu0
    %v1149 = vmax.f32 %v1023, 0.0
    %v1150 = vmax.f32 %v1026, 0.0
    %v1151 = vmax.f32 %v1031, 0.0
    %v1152 = vmax.f32 %v1034, 0.0
    %v1153 = vmax.f32 %v1039, 0.0
    %v1154 = vmax.f32 %v1042, 0.0
    %v1155 = vmax.f32 %v1047, 0.0
    %v1156 = vmax.f32 %v1050, 0.0
    %v1157 = vmax.f32 %v1055, 0.0
    %v1158 = vmax.f32 %v1058, 0.0
    %v1159 = vmax.f32 %v1063, 0.0
    %v1160 = vmax.f32 %v1066, 0.0
    %v1161 = vmax.f32 %v1071, 0.0
    %v1162 = vmax.f32 %v1074, 0.0
    %v1163 = vmax.f32 %v1079, 0.0
    %v1164 = vmax.f32 %v1082, 0.0
    %v1165 = vmax.f32 %v1087, 0.0
    %v1166 = vmax.f32 %v1090, 0.0
    %v1167 = vmax.f32 %v1095, 0.0
    %v1168 = vmax.f32 %v1098, 0.0
    %v1169 = vmax.f32 %v1103, 0.0
    %v1170 = vmax.f32 %v1106, 0.0
    %v1171 = vmax.f32 %v1111, 0.0
    %v1172 = vmax.f32 %v1114, 0.0
    %v1173 = vmax.f32 %v1119, 0.0
    %v1174 = vmax.f32 %v1122, 0.0
    %v1175 = vmax.f32 %v1127, 0.0
    %v1176 = vmax.f32 %v1130, 0.0
    %v1177 = vmax.f32 %v1135, 0.0
    %v1178 = vmax.f32 %v1138, 0.0
    %v1179 = vmax.f32 %v1143, 0.0
    %v1180 = vmax.f32 %v1146, 0.0
    %v1181 = vld [vmem:[%s5] sm:$0xff]
    %v1182 = vpack.c.bf16 %v1150, %v1149
    %v1183 = vpack.c.bf16 %v1152, %v1151
    %v1184 = vpack.c.bf16 %v1154, %v1153
    %v1185 = vpack.c.bf16 %v1156, %v1155
    %v1186 = vpack.c.bf16 %v1158, %v1157
    %v1187 = vpack.c.bf16 %v1160, %v1159
    %v1188 = vpack.c.bf16 %v1162, %v1161
    %v1189 = vpack.c.bf16 %v1164, %v1163
    %v1190 = vpack.c.bf16 %v1166, %v1165
    %v1191 = vpack.c.bf16 %v1168, %v1167
    %v1192 = vpack.c.bf16 %v1170, %v1169
    %v1193 = vpack.c.bf16 %v1172, %v1171
    %v1194 = vpack.c.bf16 %v1174, %v1173
    %v1195 = vpack.c.bf16 %v1176, %v1175
    %v1196 = vpack.c.bf16 %v1178, %v1177
    %v1197 = vpack.c.bf16 %v1180, %v1179
    %v1198 = vld [vmem:[%s6] sm:$0xff]
    %1200 = vset.pattern.permute.xlu0 0
    %1201 = vperm.xlu0 %1200, %v1198
    %v1202 = vpop.permute.xlu0 %1201
    %v1205 = vunpack.c.l.b16 %v1181
    %v1206 = vunpack.c.h.b16 %v1181
    %v1207 = vpack.c.b16 %v1205, %v1205
    %v1208 = vpack.c.b16 %v1206, %v1206
    %1211 = vmatprep.subr.bf16.mxu0 0
    %1212 = vmatpush1.bf16.msra.mxu0 %v1182
    %1213 = vmatprep.subr.bf16.mxu0 0
    %1214 = vmatpush1.bf16.msra.mxu0 %v1183
    %1215 = vmatprep.subr.bf16.mxu0 0
    %1216 = vmatpush1.bf16.msra.mxu0 %v1184
    %1217 = vmatprep.subr.bf16.mxu0 0
    %1218 = vmatpush1.bf16.msra.mxu0 %v1185
    %1219 = vmatprep.subr.bf16.mxu0 0
    %1220 = vmatpush1.bf16.msra.mxu0 %v1186
    %1221 = vmatprep.subr.bf16.mxu0 0
    %1222 = vmatpush1.bf16.msra.mxu0 %v1187
    %1223 = vmatprep.subr.bf16.mxu0 0
    %1224 = vmatpush1.bf16.msra.mxu0 %v1188
    %1225 = vmatprep.subr.bf16.mxu0 0
    %1226 = vmatpush1.bf16.msra.mxu0 %v1189
    %1227 = vmatprep.subr.bf16.mxu0 0
    %1228 = vmatpush1.bf16.msra.mxu0 %v1190
    %1229 = vmatprep.subr.bf16.mxu0 0
    %1230 = vmatpush1.bf16.msra.mxu0 %v1191
    %1231 = vmatprep.subr.bf16.mxu0 0
    %1232 = vmatpush1.bf16.msra.mxu0 %v1192
    %1233 = vmatprep.subr.bf16.mxu0 0
    %1234 = vmatpush1.bf16.msra.mxu0 %v1193
    %1235 = vmatprep.subr.bf16.mxu0 0
    %1236 = vmatpush1.bf16.msra.mxu0 %v1194
    %1237 = vmatprep.subr.bf16.mxu0 0
    %1238 = vmatpush1.bf16.msra.mxu0 %v1195
    %1239 = vmatprep.subr.bf16.mxu0 0
    %1240 = vmatpush1.bf16.msra.mxu0 %v1196
    %1241 = vmatprep.subr.bf16.mxu0 0
    %1242 = vmatpush1.bf16.msra.mxu0 %v1197
    %1243 = vmatprep.mubr.bf16.mxu0 %v1208
    %1244 = vmatmul.mubr.bf16.gmra.mrb[0].mxu0 %v1207
    %v1245 = vpop.f32.mrb[0].mxu0
    %v1246 = vadd.f32 %v1202, %v1245
    %v1247 = vpop.f32.mrb[0].mxu0
    %v1248 = vpop.f32.mrb[0].mxu0
    %v1249 = vpop.f32.mrb[0].mxu0
    %1250 = vdwg.mxu0
    %v1251 = vld [vmem:[%s7] sm:$0xff]
    %1253 = vset.pattern.permute.xlu0 0
    %1254 = vperm.xlu0 %1253, %v1251
    %v1255 = vpop.permute.xlu0 %1254
    %v1257 = vmax.f32 %v1246, %v1255
    %v1258 = vld [vmem:[%s8] sm:$0xff]
    %1260 = vset.pattern.permute.xlu0 0
    %1261 = vperm.xlu0 %1260, %v1258
    %v1262 = vpop.permute.xlu0 %1261
    %v1264 = vmin.f32 %v1257, %v1262
    %vm1265 = vcmask 523264
    %1266 = vst.msk [vmem:[#allocation2] sm:$0xff] %vm1265, %v1264
    // Predicated region
    $region38: #{tpu_custom_call.1} parent=1 // pred_check
      _
    $region39: #{tpu_custom_call.1} parent=1 // pred_check_branch
      %1268 = sbr.rel (0) target = $region41
    $region40: #{tpu_custom_call.1} parent=1 // pred_region
      %s1270 = ssub.s32 128, 128
      %1271 = vsyncadd [#allocation3], %s1270
      %s1273 = sshll.u32 [#allocation2], 4
      %s1274 = int_to_ptr.vmem [resolvable:$true] %s1273
      %1276 = dma.vmem_to_hbm [thread:$0]  %s1274, 128, %s9, [#allocation3]
    $region41: #{tpu_custom_call.1} parent=1 // pred_fallthru
      _
    // Predicated region
    $region42: #{tpu_custom_call.1} parent=1 // pred_check
      _
    $region43: #{tpu_custom_call.1} parent=1 // pred_check_branch
      %1278 = sbr.rel (0) target = $region45
    $region44: #{tpu_custom_call.1} parent=1 // pred_region
      %1279 = dma.done [#allocation3], 128
    $region45: #{tpu_custom_call.1} parent=1 // pred_fallthru
      _
    %1280 = vsyncpa [#allocation3], 1

</llo_original>
